<compile_context>
chip_gen: v7x
topology: tpu7x:2x2x1
jax: 0.10.0
libtpu: 0.0.40
codegen_flags: <defaults>
</compile_context>

<pallas_src>
import functools

import jax
import jax.numpy as jnp
from jax.experimental import pallas as pl
from jax.experimental.pallas import tpu as pltpu

LANE = 128


def _round_up(x, m):
    return (x + m - 1) // m * m


def _fused_forward_kernel(patches_ref, cw_ref, cb_ref, fw_ref, fb_ref,
                          feat_ref, out_ref, acc_ref, *, inv_hw):
    # patches_ref: (1, thw, Kpad)  bf16  im2col patches for this (b, hw) tile
    # cw_ref:      (Kpad, Cfpad)   bf16  conv weight (zero-padded)
    # cb_ref:      (1, Cfpad)      f32   conv bias   (zero-padded)
    # fw_ref:      (Cfpad, NCpad)  bf16  fc weight   (zero-padded)
    # fb_ref:      (1, NCpad)      f32   fc bias     (zero-padded)
    # feat_ref:    (1, 1, Cfpad)   f32   features (lane-dense padded slab)
    # out_ref:     (1, 1, NCpad)   f32   logits   (lane-dense padded slab)
    # acc_ref:     (1, Cfpad)      f32   running HW-sum accumulator (scratch)
    h = pl.program_id(1)

    @pl.when(h == 0)
    def _init():
        acc_ref[...] = jnp.zeros_like(acc_ref)

    # One 2-D matmul on the MXU: (thw, Kpad) @ (Kpad, Cfpad), bf16 in, f32 acc.
    p = patches_ref[0]                                       # (thw, Kpad) bf16
    conv = jnp.dot(p, cw_ref[...],
                   preferred_element_type=jnp.float32)       # (thw, Cfpad) f32
    act = jnp.maximum(conv + cb_ref[...], 0.0)               # bias + ReLU (f32 VPU)

    # Global-average-pool folded into the HW reduction axis of the grid:
    # accumulate partial sums, divide once at the last step.
    acc_ref[...] += jnp.sum(act, axis=0, keepdims=True)      # (1, Cfpad)

    @pl.when(h == pl.num_programs(1) - 1)
    def _finalize():
        feats = acc_ref[...] * inv_hw                        # (1, Cfpad) f32
        feat_ref[...] = feats[None].astype(feat_ref.dtype)   # unmasked 128-lane store
        logits = jnp.dot(feats.astype(jnp.bfloat16), fw_ref[...],
                         preferred_element_type=jnp.float32) + fb_ref[...]
        out_ref[...] = logits[None].astype(out_ref.dtype)


def _im2col_3x3_pad1(x_nhwc):
    """Extract 3x3 / padding=1 patches.  Returns (B, H*W, Cin*9)."""
    B, H, W, C = x_nhwc.shape
    xp = jnp.pad(x_nhwc, ((0, 0), (1, 1), (1, 1), (0, 0)))
    cols = []
    for dh in range(3):
        for dw in range(3):
            cols.append(xp[:, dh:dh + H, dw:dw + W, :])       # (B, H, W, C)
    patches = jnp.stack(cols, axis=-2)                        # (B, H, W, 9, C)
    return patches.reshape(B, H * W, 9 * C)


def neural_network_forward(images_nchw, params, *, thw=128):
    """images_nchw: (B, Cin, H, W) float32. Returns (features, outputs)."""
    conv_w, conv_b, fc_w, fc_b = params
    B, Cin, H, W = images_nchw.shape
    K = Cin * 9
    Cf = conv_w.shape[1]
    NC = fc_w.shape[1]
    HW = H * W

    Kpad = _round_up(K, LANE)
    Cfpad = _round_up(Cf, LANE)
    NCpad = _round_up(NC, LANE)
    thw = min(thw, HW)
    assert HW % thw == 0 and thw % 8 == 0

    # NCHW -> NHWC, im2col, cast MXU operands to bf16, zero-pad the contraction
    # axis K to a full 128-lane width so the MXU contraction is lane-dense.
    x_nhwc = jnp.transpose(images_nchw, (0, 2, 3, 1))
    patches = _im2col_3x3_pad1(x_nhwc).astype(jnp.bfloat16)   # (B, HW, K)
    patches = jnp.pad(patches, ((0, 0), (0, 0), (0, Kpad - K)))

    cw = jnp.pad(conv_w, ((0, Kpad - K), (0, Cfpad - Cf))).astype(jnp.bfloat16)
    cb = jnp.pad(conv_b, ((0, 0), (0, Cfpad - Cf))).astype(jnp.float32)
    fw = jnp.pad(fc_w, ((0, Cfpad - Cf), (0, NCpad - NC))).astype(jnp.bfloat16)
    fb = jnp.pad(fc_b, ((0, 0), (0, NCpad - NC))).astype(jnp.float32)

    kernel = functools.partial(_fused_forward_kernel, inv_hw=1.0 / float(HW))

    feat_padded, out_padded = pl.pallas_call(
        kernel,
        out_shape=(jax.ShapeDtypeStruct((B, 1, Cfpad), jnp.float32),
                   jax.ShapeDtypeStruct((B, 1, NCpad), jnp.float32)),
        grid=(B, HW // thw),                       # (batch-parallel, HW-reduction)
        in_specs=[
            pl.BlockSpec((1, thw, Kpad), lambda b, h: (b, h, 0)),
            pl.BlockSpec((Kpad, Cfpad), lambda b, h: (0, 0)),
            pl.BlockSpec((1, Cfpad), lambda b, h: (0, 0)),
            pl.BlockSpec((Cfpad, NCpad), lambda b, h: (0, 0)),
            pl.BlockSpec((1, NCpad), lambda b, h: (0, 0)),
        ],
        out_specs=(
            pl.BlockSpec((1, 1, Cfpad), lambda b, h: (b, 0, 0)),
            pl.BlockSpec((1, 1, NCpad), lambda b, h: (b, 0, 0)),
        ),
        scratch_shapes=[pltpu.VMEM((1, Cfpad), jnp.float32)],
        compiler_params=pltpu.CompilerParams(
            dimension_semantics=("parallel", "arbitrary")),
    )(patches, cw, cb, fw, fb)

    feats = feat_padded[:, 0, :Cf]
    outputs = out_padded[:, 0, :NC]
    return feats, outputs


def init_params(key, cin, cfeat, num_classes):
    k1, k2, k3, k4 = jax.random.split(key, 4)
    conv_w = jax.random.normal(k1, (cin * 9, cfeat), jnp.float32) * 0.1
    conv_b = jax.random.normal(k2, (1, cfeat), jnp.float32) * 0.01
    fc_w = jax.random.normal(k3, (cfeat, num_classes), jnp.float32) * 0.1
    fc_b = jax.random.normal(k4, (1, num_classes), jnp.float32) * 0.01
    return conv_w, conv_b, fc_w, fc_b


if __name__ == "__main__":
    key = jax.random.PRNGKey(0)
    kx, kp = jax.random.split(key)

    B, Cin, H, W = 2, 4, 16, 16
    Cfeat, num_classes = 32, 10

    images = jax.random.normal(kx, (B, Cin, H, W), jnp.float32)
    params = init_params(kp, Cin, Cfeat, num_classes)

    feats, outputs = neural_network_forward(images, params)
    jax.block_until_ready((feats, outputs))

    # sanity: reference in plain f32 JAX (kernel uses bf16 MXU operands,
    # so tolerances are bf16-scale).
    x_nhwc = jnp.transpose(images, (0, 2, 3, 1))
    p_ref = _im2col_3x3_pad1(x_nhwc)
    conv_ref = jnp.maximum(
        jnp.einsum('bpk,kc->bpc', p_ref, params[0]) + params[1], 0.0)
    feats_ref = jnp.mean(conv_ref, axis=1)
    out_ref = feats_ref @ params[2] + params[3]
    assert jnp.allclose(feats, feats_ref, atol=2e-2, rtol=2e-2)
    assert jnp.allclose(outputs, out_ref, atol=2e-2, rtol=2e-2)

    print("KERNEL_OK")
</pallas_src>

<mosaic_0001>
module attributes {stable_mosaic.version = 11 : i64} {
  func.func @_fused_forward_kernel(%arg0: i32, %arg1: i32, %arg2: memref<1x128x128xbf16, #tpu.memory_space<vmem>>, %arg3: memref<128x128xbf16, #tpu.memory_space<vmem>>, %arg4: memref<1x128xf32, #tpu.memory_space<vmem>>, %arg5: memref<128x128xbf16, #tpu.memory_space<vmem>>, %arg6: memref<1x128xf32, #tpu.memory_space<vmem>>, %arg7: memref<1x1x128xf32, #tpu.memory_space<vmem>>, %arg8: memref<1x1x128xf32, #tpu.memory_space<vmem>>, %arg9: memref<1x128xf32, #tpu.memory_space<vmem>>) attributes {dimension_semantics = [#tpu.dimension_semantics<parallel>, #tpu.dimension_semantics<arbitrary>], iteration_bounds = array<i64: 2, 2>, scalar_prefetch = 0 : i64, scratch_operands = 1 : i64, tpu.core_type = #tpu.core_type<tc>, window_params = [{transform_indices = @transform_0, window_bounds = array<i64: 1, 128, 128>}, {pipeline_mode = #tpu.pipeline_mode<synchronous>, transform_indices = @transform_1, window_bounds = array<i64: 128, 128>}, {pipeline_mode = #tpu.pipeline_mode<synchronous>, transform_indices = @transform_2, window_bounds = array<i64: 1, 128>}, {pipeline_mode = #tpu.pipeline_mode<synchronous>, transform_indices = @transform_3, window_bounds = array<i64: 128, 128>}, {pipeline_mode = #tpu.pipeline_mode<synchronous>, transform_indices = @transform_4, window_bounds = array<i64: 1, 128>}, {transform_indices = @transform_5, window_bounds = array<i64: 1, 1, 128>}, {transform_indices = @transform_6, window_bounds = array<i64: 1, 1, 128>}]} {
    %c0_i32 = arith.constant 0 : i32
    %0 = arith.cmpi eq, %arg1, %c0_i32 : i32
    %1 = arith.extui %0 : i1 to i32
    %c0_i32_0 = arith.constant 0 : i32
    %2 = arith.cmpi ne, %1, %c0_i32_0 : i32
    scf.if %2 {
      %cst_14 = arith.constant 0.000000e+00 : f32
      %20 = vector.broadcast %cst_14 : f32 to vector<1x128xf32>
      %c0_15 = arith.constant 0 : index
      %c0_16 = arith.constant 0 : index
      %21 = vector.load %arg9[%c0_15, %c0_16] : memref<1x128xf32, #tpu.memory_space<vmem>>, vector<1x128xf32>
      tpu.vector_store %arg9[%c0_15, %c0_16], %20 {strides = array<i32>} : memref<1x128xf32, #tpu.memory_space<vmem>>, vector<1x128xf32>,
    } else {
    }
    %c0 = arith.constant 0 : index
    %c0_1 = arith.constant 0 : index
    %c0_2 = arith.constant 0 : index
    %3 = vector.load %arg2[%c0, %c0_1, %c0_2] : memref<1x128x128xbf16, #tpu.memory_space<vmem>>, vector<1x128x128xbf16>
    %4 = vector.shape_cast %3 : vector<1x128x128xbf16> to vector<128x128xbf16>
    %c0_3 = arith.constant 0 : index
    %c0_4 = arith.constant 0 : index
    %5 = vector.load %arg3[%c0_3, %c0_4] : memref<128x128xbf16, #tpu.memory_space<vmem>>, vector<128x128xbf16>
    %cst = arith.constant dense<0.000000e+00> : vector<128x128xf32>
    %6 = tpu.matmul %4, %5, %cst {dimension_numbers = #tpu.dot_dimension_numbers<[1], [0], [0], [1], [0, 0, 1, 1], [], []>} : vector<128x128xbf16>, vector<128x128xbf16>, vector<128x128xf32> -> vector<128x128xf32>
    %c0_5 = arith.constant 0 : index
    %c0_6 = arith.constant 0 : index
    %7 = vector.load %arg4[%c0_5, %c0_6] : memref<1x128xf32, #tpu.memory_space<vmem>>, vector<1x128xf32>
    %8 = vector.broadcast %7 : vector<1x128xf32> to vector<128x128xf32>
    %9 = arith.addf %6, %8 : vector<128x128xf32>
    %cst_7 = arith.constant 0.000000e+00 : f32
    %10 = vector.broadcast %cst_7 : f32 to vector<128x128xf32>
    %11 = arith.maximumf %9, %10 : vector<128x128xf32>
    %c0_8 = arith.constant 0 : index
    %c0_9 = arith.constant 0 : index
    %12 = vector.load %arg9[%c0_8, %c0_9] : memref<1x128xf32, #tpu.memory_space<vmem>>, vector<1x128xf32>
    %cst_10 = arith.constant dense<0.000000e+00> : vector<128xf32>
    %13 = vector.multi_reduction <add>, %11, %cst_10 [0] : vector<128x128xf32> to vector<128xf32>
    %14 = vector.shape_cast %13 : vector<128xf32> to vector<1x128xf32>
    %15 = arith.addf %12, %14 : vector<1x128xf32>
    %c0_11 = arith.constant 0 : index
    %c0_12 = arith.constant 0 : index
    %16 = vector.load %arg9[%c0_11, %c0_12] : memref<1x128xf32, #tpu.memory_space<vmem>>, vector<1x128xf32>
    tpu.vector_store %arg9[%c0_11, %c0_12], %15 {strides = array<i32>} : memref<1x128xf32, #tpu.memory_space<vmem>>, vector<1x128xf32>,
    %c1_i32 = arith.constant 1 : i32
    %17 = arith.cmpi eq, %arg1, %c1_i32 : i32
    %18 = arith.extui %17 : i1 to i32
    %c0_i32_13 = arith.constant 0 : i32
    %19 = arith.cmpi ne, %18, %c0_i32_13 : i32
    scf.if %19 {
      %c0_14 = arith.constant 0 : index
      %c0_15 = arith.constant 0 : index
      %20 = vector.load %arg9[%c0_14, %c0_15] : memref<1x128xf32, #tpu.memory_space<vmem>>, vector<1x128xf32>
      %cst_16 = arith.constant 3.906250e-03 : f32
      %21 = vector.broadcast %cst_16 : f32 to vector<1x128xf32>
      %22 = arith.mulf %20, %21 : vector<1x128xf32>
      %23 = vector.shape_cast %22 : vector<1x128xf32> to vector<1x1x128xf32>
      %c0_17 = arith.constant 0 : index
      %c0_18 = arith.constant 0 : index
      %c0_19 = arith.constant 0 : index
      %24 = vector.load %arg7[%c0_17, %c0_18, %c0_19] : memref<1x1x128xf32, #tpu.memory_space<vmem>>, vector<1x1x128xf32>
      tpu.vector_store %arg7[%c0_17, %c0_18, %c0_19], %23 {strides = array<i32>} : memref<1x1x128xf32, #tpu.memory_space<vmem>>, vector<1x1x128xf32>,
      %25 = arith.truncf %22 : vector<1x128xf32> to vector<1x128xbf16>
      %c0_20 = arith.constant 0 : index
      %c0_21 = arith.constant 0 : index
      %26 = vector.load %arg5[%c0_20, %c0_21] : memref<128x128xbf16, #tpu.memory_space<vmem>>, vector<128x128xbf16>
      %cst_22 = arith.constant dense<0.000000e+00> : vector<1x128xf32>
      %27 = tpu.matmul %25, %26, %cst_22 {dimension_numbers = #tpu.dot_dimension_numbers<[1], [0], [0], [1], [0, 0, 1, 1], [], []>} : vector<1x128xbf16>, vector<128x128xbf16>, vector<1x128xf32> -> vector<1x128xf32>
      %c0_23 = arith.constant 0 : index
      %c0_24 = arith.constant 0 : index
      %28 = vector.load %arg6[%c0_23, %c0_24] : memref<1x128xf32, #tpu.memory_space<vmem>>, vector<1x128xf32>
      %29 = arith.addf %27, %28 : vector<1x128xf32>
      %30 = vector.shape_cast %29 : vector<1x128xf32> to vector<1x1x128xf32>
      %c0_25 = arith.constant 0 : index
      %c0_26 = arith.constant 0 : index
      %c0_27 = arith.constant 0 : index
      %31 = vector.load %arg8[%c0_25, %c0_26, %c0_27] : memref<1x1x128xf32, #tpu.memory_space<vmem>>, vector<1x1x128xf32>
      tpu.vector_store %arg8[%c0_25, %c0_26, %c0_27], %30 {strides = array<i32>} : memref<1x1x128xf32, #tpu.memory_space<vmem>>, vector<1x1x128xf32>,
    } else {
    }
    return
  }
  func.func @transform_0(%arg0: i32, %arg1: i32) -> (i32, i32, i32) {
    %c0_i32 = arith.constant 0 : i32
    %c0_i32_0 = arith.constant 0 : i32
    return %arg0, %arg1, %c0_i32 : i32, i32, i32
  }
  func.func @transform_1(%arg0: i32, %arg1: i32) -> (i32, i32) {
    %c0_i32 = arith.constant 0 : i32
    %c0_i32_0 = arith.constant 0 : i32
    %c0_i32_1 = arith.constant 0 : i32
    return %c0_i32, %c0_i32_0 : i32, i32
  }
  func.func @transform_2(%arg0: i32, %arg1: i32) -> (i32, i32) {
    %c0_i32 = arith.constant 0 : i32
    %c0_i32_0 = arith.constant 0 : i32
    %c0_i32_1 = arith.constant 0 : i32
    return %c0_i32, %c0_i32_0 : i32, i32
  }
  func.func @transform_3(%arg0: i32, %arg1: i32) -> (i32, i32) {
    %c0_i32 = arith.constant 0 : i32
    %c0_i32_0 = arith.constant 0 : i32
    %c0_i32_1 = arith.constant 0 : i32
    return %c0_i32, %c0_i32_0 : i32, i32
  }
  func.func @transform_4(%arg0: i32, %arg1: i32) -> (i32, i32) {
    %c0_i32 = arith.constant 0 : i32
    %c0_i32_0 = arith.constant 0 : i32
    %c0_i32_1 = arith.constant 0 : i32
    return %c0_i32, %c0_i32_0 : i32, i32
  }
  func.func @transform_5(%arg0: i32, %arg1: i32) -> (i32, i32, i32) {
    %c0_i32 = arith.constant 0 : i32
    %c0_i32_0 = arith.constant 0 : i32
    %c0_i32_1 = arith.constant 0 : i32
    return %arg0, %c0_i32, %c0_i32_0 : i32, i32, i32
  }
  func.func @transform_6(%arg0: i32, %arg1: i32) -> (i32, i32, i32) {
    %c0_i32 = arith.constant 0 : i32
    %c0_i32_0 = arith.constant 0 : i32
    %c0_i32_1 = arith.constant 0 : i32
    return %arg0, %c0_i32, %c0_i32_0 : i32, i32, i32
  }
}

</mosaic_0001>

<llo_original>
// kernel: tpu_custom_call.1
$region0: #{tpu_custom_call.1}
  #allocation0 [shape = 'u32[]', space=smem, size = 0x4, offset = 0x4, fixed_abs, tag = 'smem constant byte address 0x4 - core index']
  #allocation1 [shape = 'u32[144,128]{1,0:T(1,128)}', space=vmem, size = 0x12000, scoped, tag = 'internal scratch']
  #allocation2 [shape = 'f32[1,128]{1,0:T(1,128)}', space=vmem, size = 0x200, scoped, tag = 'scratch operand']
  %s0 = inlined_call_operand.hbm [shape: bf16[2,256,128], index: 0, kind: input, shape index: {}]
  %s1 = inlined_call_operand.hbm [shape: bf16[128,128], index: 1, kind: input, shape index: {}]
  %s2 = inlined_call_operand.vmem [shape: f32[1,128], index: 2, kind: input, shape index: {}]
  %s3 = inlined_call_operand.hbm [shape: bf16[128,128], index: 3, kind: input, shape index: {}]
  %s4 = inlined_call_operand.vmem [shape: f32[1,128], index: 4, kind: input, shape index: {}]
  %s5 = inlined_call_operand.hbm [shape: f32[2,1,128], index: 5, kind: output, shape index: {0}]
  %s6 = inlined_call_operand.hbm [shape: f32[2,1,128], index: 6, kind: output, shape index: {1}]
  %7 = xla_tuple %s5, %s6
  %s8 = sld [smem:[#allocation0]]
  $region81: #{tpu_custom_call.1} parent=0
    _
  %s10 = ssub.s32 1, %s8
  %s11 = scalar_select 0, %s10, %s8
  $region1: #{tpu_custom_call.1} parent=0
    #allocation3 [shape = 'u8[65536]{0}', space=vmem, size = 0x10000, scoped, tag = 'input window, operand 0']
    #allocation4 [shape = 's32[2]{0}', space=sflag, size = 0x8, scoped, tag = 'scoped memory for tpu_custom_call.1']
    #allocation5 [shape = 's32[2]{0}', space=sflag, size = 0x8, scoped, tag = 'scoped memory for tpu_custom_call.1']
    #allocation6 [shape = 'u8[32768]{0}', space=vmem, size = 0x8000, scoped, tag = 'input window, operand 1, single buffered']
    #allocation7 [shape = 's32[1]{0}', space=sflag, size = 0x4, scoped, tag = 'scoped memory for tpu_custom_call.1']
    #allocation8 [shape = 'u8[32768]{0}', space=vmem, size = 0x8000, scoped, tag = 'input window, operand 3, single buffered']
    #allocation9 [shape = 'u8[1024]{0}', space=vmem, size = 0x400, scoped, tag = 'output window, operand 0']
    #allocation10 [shape = 'u8[1024]{0}', space=vmem, size = 0x400, scoped, tag = 'output window, operand 1']
    #allocation11 [shape = 's32[2]{0}', space=sflag, size = 0x8, scoped, tag = 'scoped memory for tpu_custom_call.1']
    %12 = vsyncpa [#allocation4], 0
    %s13 = scalar_lea.sflag [#allocation4], 1
    %14 = vsyncpa %s13, 0
    %15 = vsyncpa [#allocation7], 0
    %16 = vsyncpa [#allocation5], 0
    %s17 = scalar_lea.sflag [#allocation5], 1
    %18 = vsyncpa %s17, 0
    %19 = vsyncpa [#allocation11], 0
    %s20 = scalar_lea.sflag [#allocation11], 1
    %21 = vsyncpa %s20, 0
    loop: start=0, step=1, limit=6
    $region2: #{tpu_custom_call.1} parent=1 // loop_pre_header
      _
    $region3: #{tpu_custom_call.1} parent=1 // loop_header
      %s23 = sphi 0, %s27
      %p24 = scmp.ge.s32.totalorder %s23, 6
      %s30 = sphi 0, %s42
      %s31 = sphi 0, %s38
      %s32 = sphi 0, %s30
      %s33 = sphi 0, %s31
      %s34 = sphi 0, %s32
      %s35 = sphi 0, %s33
      %s47 = sphi 0, %s49
      %s50 = sphi 0, %s47
      %s51 = sphi 0, %s50
      %s67 = sphi 0, %s51
      %s71 = sphi 0, %s71
      %s73 = sphi 0, %s71
      %s74 = sphi 0, %s73
      %s88 = sphi 0, %s74
      %s92 = sphi 0, %s92
      %s94 = sphi 0, %s92
      %s95 = sphi 0, %s94
      %s109 = sphi 0, %s95
      %s113 = sphi 0, %s113
      %s115 = sphi 0, %s113
      %s116 = sphi 0, %s115
      %s130 = sphi 0, %s116
      %s134 = sphi 0, %s134
      %s136 = sphi 0, %s134
      %s137 = sphi 0, %s136
      %s151 = sphi 0, %s137
      %s157 = sphi 0, %s159
      %s160 = sphi 0, %s157
      %s161 = sphi 0, %s160
      %s177 = sphi 0, %s161
      %s183 = sphi 0, %s185
      %s186 = sphi 0, %s183
      %s187 = sphi 0, %s186
      %s203 = sphi 0, %s187
    $region4: #{tpu_custom_call.1} parent=1 // loop_header_branch
      %26 = sbr.rel (%p24) target = $region8
    $region5: #{tpu_custom_call.1} parent=1 // loop_body
      %s28 = ssub.s32 %s23, 1
      %s29 = ssub.s32 %s23, 2
      %s36 = sadd.s32 1, %s31
      %p37 = scmp.ge.s32.totalorder %s36, 2
      %s38 = scalar_select %p37, 0, %s36
      %s39 = sadd.s32 1, %s30
      %s40 = scalar_select %p37, %s39, %s30
      %p41 = scmp.ge.s32.totalorder %s40, 2
      %s42 = scalar_select %p41, 0, %s40
      %s43 = ssub.s32 %s30, %s42
      %s44 = ssub.s32 %s31, %s38
      %s45 = sor.u32 %s43, %s44
      %p46 = scmp.eq.s32.totalorder %s45, 0
      %s48 = sadd.s32 %s47, 1
      %s49 = scalar_select %p46, %s47, %s48
      %p52 = pneg %p46
      %p53 = scmp.eq.s32.totalorder %s23, 3
      %p54 = por %p52, %p53
      %p55 = scmp.ne.s32.totalorder %s47, %s50
      %p56 = scmp.eq.s32.totalorder %s23, 0
      %p57 = por %p55, %p56
      %p58 = scmp.ne.s32.totalorder %s47, %s50
      %p59 = scmp.eq.s32.totalorder %s28, 3
      %p60 = por %p58, %p59
      %p61 = scmp.ne.s32.totalorder %s50, %s51
      %p62 = scmp.eq.s32.totalorder %s28, 0
      %p63 = por %p61, %p62
      %p64 = scmp.ne.s32.totalorder %s50, %s51
      %p65 = scmp.eq.s32.totalorder %s29, 3
      %p66 = por %p64, %p65
      %p68 = scmp.ne.s32.totalorder %s51, %s67
      %p69 = scmp.eq.s32.totalorder %s29, 0
      %p70 = por %p68, %p69
      %s72 = sadd.s32 %s71, 1
      %p75 = scmp.eq.s32.totalorder %s23, 3
      %p76 = scmp.ne.s32.totalorder %s71, %s73
      %p77 = scmp.eq.s32.totalorder %s23, 0
      %p78 = por %p76, %p77
      %p79 = scmp.ne.s32.totalorder %s71, %s73
      %p80 = scmp.eq.s32.totalorder %s28, 3
      %p81 = por %p79, %p80
      %p82 = scmp.ne.s32.totalorder %s73, %s74
      %p83 = scmp.eq.s32.totalorder %s28, 0
      %p84 = por %p82, %p83
      %p85 = scmp.ne.s32.totalorder %s73, %s74
      %p86 = scmp.eq.s32.totalorder %s29, 3
      %p87 = por %p85, %p86
      %p89 = scmp.ne.s32.totalorder %s74, %s88
      %p90 = scmp.eq.s32.totalorder %s29, 0
      %p91 = por %p89, %p90
      %s93 = sadd.s32 %s92, 1
      %p96 = scmp.eq.s32.totalorder %s23, 3
      %p97 = scmp.ne.s32.totalorder %s92, %s94
      %p98 = scmp.eq.s32.totalorder %s23, 0
      %p99 = por %p97, %p98
      %p100 = scmp.ne.s32.totalorder %s92, %s94
      %p101 = scmp.eq.s32.totalorder %s28, 3
      %p102 = por %p100, %p101
      %p103 = scmp.ne.s32.totalorder %s94, %s95
      %p104 = scmp.eq.s32.totalorder %s28, 0
      %p105 = por %p103, %p104
      %p106 = scmp.ne.s32.totalorder %s94, %s95
      %p107 = scmp.eq.s32.totalorder %s29, 3
      %p108 = por %p106, %p107
      %p110 = scmp.ne.s32.totalorder %s95, %s109
      %p111 = scmp.eq.s32.totalorder %s29, 0
      %p112 = por %p110, %p111
      %s114 = sadd.s32 %s113, 1
      %p117 = scmp.eq.s32.totalorder %s23, 3
      %p118 = scmp.ne.s32.totalorder %s113, %s115
      %p119 = scmp.eq.s32.totalorder %s23, 0
      %p120 = por %p118, %p119
      %p121 = scmp.ne.s32.totalorder %s113, %s115
      %p122 = scmp.eq.s32.totalorder %s28, 3
      %p123 = por %p121, %p122
      %p124 = scmp.ne.s32.totalorder %s115, %s116
      %p125 = scmp.eq.s32.totalorder %s28, 0
      %p126 = por %p124, %p125
      %p127 = scmp.ne.s32.totalorder %s115, %s116
      %p128 = scmp.eq.s32.totalorder %s29, 3
      %p129 = por %p127, %p128
      %p131 = scmp.ne.s32.totalorder %s116, %s130
      %p132 = scmp.eq.s32.totalorder %s29, 0
      %p133 = por %p131, %p132
      %s135 = sadd.s32 %s134, 1
      %p138 = scmp.eq.s32.totalorder %s23, 3
      %p139 = scmp.ne.s32.totalorder %s134, %s136
      %p140 = scmp.eq.s32.totalorder %s23, 0
      %p141 = por %p139, %p140
      %p142 = scmp.ne.s32.totalorder %s134, %s136
      %p143 = scmp.eq.s32.totalorder %s28, 3
      %p144 = por %p142, %p143
      %p145 = scmp.ne.s32.totalorder %s136, %s137
      %p146 = scmp.eq.s32.totalorder %s28, 0
      %p147 = por %p145, %p146
      %p148 = scmp.ne.s32.totalorder %s136, %s137
      %p149 = scmp.eq.s32.totalorder %s29, 3
      %p150 = por %p148, %p149
      %p152 = scmp.ne.s32.totalorder %s137, %s151
      %p153 = scmp.eq.s32.totalorder %s29, 0
      %p154 = por %p152, %p153
      %s155 = ssub.s32 %s30, %s42
      %p156 = scmp.eq.s32.totalorder %s155, 0
      %s158 = sadd.s32 %s157, 1
      %s159 = scalar_select %p156, %s157, %s158
      %p162 = pneg %p156
      %p163 = scmp.eq.s32.totalorder %s23, 3
      %p164 = por %p162, %p163
      %p165 = scmp.ne.s32.totalorder %s157, %s160
      %p166 = scmp.eq.s32.totalorder %s23, 0
      %p167 = por %p165, %p166
      %p168 = scmp.ne.s32.totalorder %s157, %s160
      %p169 = scmp.eq.s32.totalorder %s28, 3
      %p170 = por %p168, %p169
      %p171 = scmp.ne.s32.totalorder %s160, %s161
      %p172 = scmp.eq.s32.totalorder %s28, 0
      %p173 = por %p171, %p172
      %p174 = scmp.ne.s32.totalorder %s160, %s161
      %p175 = scmp.eq.s32.totalorder %s29, 3
      %p176 = por %p174, %p175
      %p178 = scmp.ne.s32.totalorder %s161, %s177
      %p179 = scmp.eq.s32.totalorder %s29, 0
      %p180 = por %p178, %p179
      %s181 = ssub.s32 %s30, %s42
      %p182 = scmp.eq.s32.totalorder %s181, 0
      %s184 = sadd.s32 %s183, 1
      %s185 = scalar_select %p182, %s183, %s184
      %p188 = pneg %p182
      %p189 = scmp.eq.s32.totalorder %s23, 3
      %p190 = por %p188, %p189
      %p191 = scmp.ne.s32.totalorder %s183, %s186
      %p192 = scmp.eq.s32.totalorder %s23, 0
      %p193 = por %p191, %p192
      %p194 = scmp.ne.s32.totalorder %s183, %s186
      %p195 = scmp.eq.s32.totalorder %s28, 3
      %p196 = por %p194, %p195
      %p197 = scmp.ne.s32.totalorder %s186, %s187
      %p198 = scmp.eq.s32.totalorder %s28, 0
      %p199 = por %p197, %p198
      %p200 = scmp.ne.s32.totalorder %s186, %s187
      %p201 = scmp.eq.s32.totalorder %s29, 3
      %p202 = por %p200, %p201
      %p204 = scmp.ne.s32.totalorder %s187, %s203
      %p205 = scmp.eq.s32.totalorder %s29, 0
      %p206 = por %p204, %p205
      %p207 = scmp.le.s32.totalorder 1, %s23
      %p208 = scmp.lt.s32.totalorder %s23, 5
      %p209 = pnand %p207, %p208
      %p210 = pneg %p209
      // Predicated region
      $region9: #{tpu_custom_call.1} parent=5 // pred_check
        _
      $region10: #{tpu_custom_call.1} parent=5 // pred_check_branch
        %212 = sbr.rel (%p209) target = $region12
      $region11: #{tpu_custom_call.1} parent=5 // pred_region
        %s213 = ssub.s32 %s23, 1
        // Predicated region
        $region13: #{tpu_custom_call.1} parent=11 // pred_check
          %p214 = pneg %p84
        $region14: #{tpu_custom_call.1} parent=11 // pred_check_branch
          %216 = sbr.rel (%p214) target = $region16
        $region15: #{tpu_custom_call.1} parent=11 // pred_region
          %s218 = ssub.s32 1024, 1024
          %219 = vsyncadd [#allocation7], %s218
          %s220 = sshll.u32 [#allocation6], 4
          %s221 = int_to_ptr.vmem [resolvable:$true] %s220
          %226 = dma.hbm_to_vmem [thread:$0]  %s1, 1024, %s221, [#allocation7], 64, 64, 4
        $region16: #{tpu_custom_call.1} parent=11 // pred_fallthru
          _
        // Predicated region
        $region17: #{tpu_custom_call.1} parent=11 // pred_check
          %p227 = pneg %p105
        $region18: #{tpu_custom_call.1} parent=11 // pred_check_branch
          %229 = sbr.rel (%p227) target = $region20
        $region19: #{tpu_custom_call.1} parent=11 // pred_region
          _
        $region20: #{tpu_custom_call.1} parent=11 // pred_fallthru
          _
        // Predicated region
        $region21: #{tpu_custom_call.1} parent=11 // pred_check
          %p230 = pneg %p126
        $region22: #{tpu_custom_call.1} parent=11 // pred_check_branch
          %232 = sbr.rel (%p230) target = $region24
        $region23: #{tpu_custom_call.1} parent=11 // pred_region
          %s234 = ssub.s32 1024, 1024
          %235 = vsyncadd [#allocation7], %s234
          %s236 = sshll.u32 [#allocation8], 4
          %s237 = int_to_ptr.vmem [resolvable:$true] %s236
          %242 = dma.hbm_to_vmem [thread:$0]  %s3, 1024, %s237, [#allocation7], 64, 64, 4
        $region24: #{tpu_custom_call.1} parent=11 // pred_fallthru
          _
        // Predicated region
        $region25: #{tpu_custom_call.1} parent=11 // pred_check
          %p243 = pneg %p147
        $region26: #{tpu_custom_call.1} parent=11 // pred_check_branch
          %245 = sbr.rel (%p243) target = $region28
        $region27: #{tpu_custom_call.1} parent=11 // pred_region
          _
        $region28: #{tpu_custom_call.1} parent=11 // pred_fallthru
          _
      $region12: #{tpu_custom_call.1} parent=5 // pred_fallthru
        _
      %p246 = scmp.lt.s32.totalorder %s23, 4
      // Predicated region
      $region29: #{tpu_custom_call.1} parent=5 // pred_check
        %p247 = pneg %p246
      $region30: #{tpu_custom_call.1} parent=5 // pred_check_branch
        %249 = sbr.rel (%p247) target = $region32
      $region31: #{tpu_custom_call.1} parent=5 // pred_region
        // Predicated region
        $region33: #{tpu_custom_call.1} parent=31 // pred_check
          %p250 = pneg %p57
        $region34: #{tpu_custom_call.1} parent=31 // pred_check_branch
          %252 = sbr.rel (%p250) target = $region36
        $region35: #{tpu_custom_call.1} parent=31 // pred_region
          %s253 = sand.u32 %s47, 1
          %s254 = scalar_lea.sflag [#allocation4], %s253
          %s255 = sand.u32 %s47, 1
          %s256 = smul.addr %s255, 64
          %s257 = scalar_lea.vmem [#allocation3], %s256
          %s258 = smul.u32 16, %s31
          %s260 = ssub.s32 1024, 1024
          %261 = vsyncadd %s254, %s260
          %s262 = smul.addr %s30, 32
          %s263 = sadd.s32 %s258, %s262
          %s264 = smul.addr %s263, 64
          %s265 = scalar_lea.hbm %s0, %s264
          %s266 = sshll.u32 %s257, 4
          %s267 = int_to_ptr.vmem [resolvable:$true] %s266
          %272 = dma.hbm_to_vmem [thread:$0]  %s265, 1024, %s267, %s254, 64, 64, 4
        $region36: #{tpu_custom_call.1} parent=31 // pred_fallthru
          _
      $region32: #{tpu_custom_call.1} parent=5 // pred_fallthru
        _
      %p273 = scmp.le.s32.totalorder 1, %s23
      %p274 = scmp.lt.s32.totalorder %s23, 5
      %p275 = pnand %p273, %p274
      %p276 = pneg %p275
      // Predicated region
      $region37: #{tpu_custom_call.1} parent=5 // pred_check
        _
      $region38: #{tpu_custom_call.1} parent=5 // pred_check_branch
        %278 = sbr.rel (%p275) target = $region40
      $region39: #{tpu_custom_call.1} parent=5 // pred_region
        %s279 = ssub.s32 %s23, 1
        %s280 = sand.u32 %s50, 1
        %s281 = scalar_lea.sflag [#allocation4], %s280
        %s282 = sand.u32 %s50, 1
        %s283 = smul.addr %s282, 64
        %s284 = scalar_lea.vmem [#allocation3], %s283
        // Predicated region
        $region41: #{tpu_custom_call.1} parent=39 // pred_check
          %p285 = pneg %p63
        $region42: #{tpu_custom_call.1} parent=39 // pred_check_branch
          %287 = sbr.rel (%p285) target = $region44
        $region43: #{tpu_custom_call.1} parent=39 // pred_region
          %288 = dma.done %s281, 1024
        $region44: #{tpu_custom_call.1} parent=39 // pred_fallthru
          _
        // Predicated region
        $region45: #{tpu_custom_call.1} parent=39 // pred_check
          %p289 = pneg %p84
        $region46: #{tpu_custom_call.1} parent=39 // pred_check_branch
          %291 = sbr.rel (%p289) target = $region48
        $region47: #{tpu_custom_call.1} parent=39 // pred_region
          %292 = dma.done [#allocation7], 1024
        $region48: #{tpu_custom_call.1} parent=39 // pred_fallthru
          _
        // Predicated region
        $region49: #{tpu_custom_call.1} parent=39 // pred_check
          %p293 = pneg %p126
        $region50: #{tpu_custom_call.1} parent=39 // pred_check_branch
          %295 = sbr.rel (%p293) target = $region52
        $region51: #{tpu_custom_call.1} parent=39 // pred_region
          %296 = dma.done [#allocation7], 1024
        $region52: #{tpu_custom_call.1} parent=39 // pred_fallthru
          _
        %s297 = sand.u32 %s50, 1
        %s298 = scalar_lea.sflag [#allocation4], %s297
        %s299 = sand.u32 %s50, 1
        %s300 = smul.addr %s299, 64
        %s301 = scalar_lea.vmem [#allocation3], %s300
        %p302 = pneg %p63
        %p303 = pneg %p60
        %p304 = pneg %p84
        %p305 = pneg %p81
        %p306 = pneg %p105
        %p307 = pneg %p102
        %p308 = pneg %p126
        %p309 = pneg %p123
        %p310 = pneg %p147
        %p311 = pneg %p144
        %p312 = pneg %p173
        %p313 = pneg %p170
        %s314 = sand.u32 %s160, 1
        %s315 = scalar_lea.sflag [#allocation5], %s314
        %s316 = sand.u32 %s160, 1
        %s317 = scalar_lea.vmem [#allocation9], %s316
        %p318 = pneg %p199
        %p319 = pneg %p196
        %s320 = sand.u32 %s186, 1
        %s321 = scalar_lea.sflag [#allocation11], %s320
        %s322 = sand.u32 %s186, 1
        %s323 = scalar_lea.vmem [#allocation10], %s322
        %s324 = smul.u32 16, %s33
        %p326 = scmp.eq.s32.totalorder %s33, 0
        // Predicated region
        $region53: #{tpu_custom_call.1} parent=39 // pred_check
          %p327 = pneg %p326
        $region54: #{tpu_custom_call.1} parent=39 // pred_check_branch
          %329 = sbr.rel (%p327) target = $region56
        $region55: #{tpu_custom_call.1} parent=39 // pred_region
          %330 = vst [vmem:[#allocation2] sm:$0x1] 0.0
        $region56: #{tpu_custom_call.1} parent=39 // pred_fallthru
          _
        %v331 = vld [vmem:[%s284] sm:$0xf]
        %v332 = vld [vmem:[%s284 + $0x4] sm:$0xf]
        %v333 = vld [vmem:[%s284 + $0x8] sm:$0xf]
        %v334 = vld [vmem:[%s284 + $0xc] sm:$0xf]
        %v335 = vld [vmem:[%s284 + $0x10] sm:$0xf]
        %v336 = vld [vmem:[%s284 + $0x14] sm:$0xf]
        %v337 = vld [vmem:[%s284 + $0x18] sm:$0xf]
        %v338 = vld [vmem:[%s284 + $0x1c] sm:$0xf]
        %v339 = vld [vmem:[%s284 + $0x20] sm:$0xf]
        %v340 = vld [vmem:[%s284 + $0x24] sm:$0xf]
        %v341 = vld [vmem:[%s284 + $0x28] sm:$0xf]
        %v342 = vld [vmem:[%s284 + $0x2c] sm:$0xf]
        %v343 = vld [vmem:[%s284 + $0x30] sm:$0xf]
        %v344 = vld [vmem:[%s284 + $0x34] sm:$0xf]
        %v345 = vld [vmem:[%s284 + $0x38] sm:$0xf]
        %v346 = vld [vmem:[%s284 + $0x3c] sm:$0xf]
        %v347 = vld [vmem:[#allocation6] sm:$0xf]
        %v348 = vld [vmem:[#allocation6 + $0x4] sm:$0xf]
        %v349 = vld [vmem:[#allocation6 + $0x8] sm:$0xf]
        %v350 = vld [vmem:[#allocation6 + $0xc] sm:$0xf]
        %v351 = vld [vmem:[#allocation6 + $0x10] sm:$0xf]
        %v352 = vld [vmem:[#allocation6 + $0x14] sm:$0xf]
        %v353 = vld [vmem:[#allocation6 + $0x18] sm:$0xf]
        %v354 = vld [vmem:[#allocation6 + $0x1c] sm:$0xf]
        %v355 = vld [vmem:[#allocation6 + $0x20] sm:$0xf]
        %v356 = vld [vmem:[#allocation6 + $0x24] sm:$0xf]
        %v357 = vld [vmem:[#allocation6 + $0x28] sm:$0xf]
        %v358 = vld [vmem:[#allocation6 + $0x2c] sm:$0xf]
        %v359 = vld [vmem:[#allocation6 + $0x30] sm:$0xf]
        %v360 = vld [vmem:[#allocation6 + $0x34] sm:$0xf]
        %v361 = vld [vmem:[#allocation6 + $0x38] sm:$0xf]
        %v362 = vld [vmem:[#allocation6 + $0x3c] sm:$0xf]
        %v363 = vld [vmem:[%s2] sm:$0x1]
        %v365 = vlaneseq
        %v366 = vshrl.u32 %v365, 7
        %v367 = vsub.s32 0, %v366
        %v368 = vrot.slane %v363, %v367
        %v386 = vunpack.c.l.b16 %v331
        %v387 = vunpack.c.l.b16 %v332
        %v388 = vunpack.c.l.b16 %v333
        %v389 = vunpack.c.l.b16 %v334
        %v390 = vunpack.c.l.b16 %v335
        %v391 = vunpack.c.l.b16 %v336
        %v392 = vunpack.c.l.b16 %v337
        %v393 = vunpack.c.l.b16 %v338
        %v394 = vunpack.c.l.b16 %v339
        %v395 = vunpack.c.l.b16 %v340
        %v396 = vunpack.c.l.b16 %v341
        %v397 = vunpack.c.l.b16 %v342
        %v398 = vunpack.c.l.b16 %v343
        %v399 = vunpack.c.l.b16 %v344
        %v400 = vunpack.c.l.b16 %v345
        %v401 = vunpack.c.l.b16 %v346
        %v402 = vpack.c.b16 %v387, %v386
        %v403 = vpack.c.b16 %v389, %v388
        %v404 = vpack.c.b16 %v391, %v390
        %v405 = vpack.c.b16 %v393, %v392
        %v406 = vpack.c.b16 %v395, %v394
        %v407 = vpack.c.b16 %v397, %v396
        %v408 = vpack.c.b16 %v399, %v398
        %v409 = vpack.c.b16 %v401, %v400
        %v434 = vunpack.c.l.b16 %v347
        %v435 = vunpack.c.l.b16 %v348
        %v436 = vunpack.c.l.b16 %v349
        %v437 = vunpack.c.l.b16 %v350
        %v438 = vunpack.c.l.b16 %v351
        %v439 = vunpack.c.l.b16 %v352
        %v440 = vunpack.c.l.b16 %v353
        %v441 = vunpack.c.l.b16 %v354
        %v442 = vunpack.c.l.b16 %v355
        %v443 = vunpack.c.l.b16 %v356
        %v444 = vunpack.c.l.b16 %v357
        %v445 = vunpack.c.l.b16 %v358
        %v446 = vunpack.c.l.b16 %v359
        %v447 = vunpack.c.l.b16 %v360
        %v448 = vunpack.c.l.b16 %v361
        %v449 = vunpack.c.l.b16 %v362
        %v450 = vpack.c.b16 %v435, %v434
        %v451 = vpack.c.b16 %v437, %v436
        %v452 = vpack.c.b16 %v439, %v438
        %v453 = vpack.c.b16 %v441, %v440
        %v454 = vpack.c.b16 %v443, %v442
        %v455 = vpack.c.b16 %v445, %v444
        %v456 = vpack.c.b16 %v447, %v446
        %v457 = vpack.c.b16 %v449, %v448
        %466 = vmatprep.subr.bf16.mxu0 0
        %467 = vmatpush1.bf16.msra.mxu0 %v450
        %468 = vmatprep.subr.bf16.mxu0 0
        %469 = vmatpush1.bf16.msra.mxu0 %v451
        %470 = vmatprep.subr.bf16.mxu0 0
        %471 = vmatpush1.bf16.msra.mxu0 %v452
        %472 = vmatprep.subr.bf16.mxu0 0
        %473 = vmatpush1.bf16.msra.mxu0 %v453
        %474 = vmatprep.subr.bf16.mxu0 0
        %475 = vmatpush1.bf16.msra.mxu0 %v454
        %476 = vmatprep.subr.bf16.mxu0 0
        %477 = vmatpush1.bf16.msra.mxu0 %v455
        %478 = vmatprep.subr.bf16.mxu0 0
        %479 = vmatpush1.bf16.msra.mxu0 %v456
        %480 = vmatprep.subr.bf16.mxu0 0
        %481 = vmatpush1.bf16.msra.mxu0 %v457
        %482 = vmatprep.subr.bf16.mxu0 0
        %483 = vmatpush1.bf16.msra.mxu0 0
        %484 = vmatprep.subr.bf16.mxu0 0
        %485 = vmatpush1.bf16.msra.mxu0 0
        %486 = vmatprep.subr.bf16.mxu0 0
        %487 = vmatpush1.bf16.msra.mxu0 0
        %488 = vmatprep.subr.bf16.mxu0 0
        %489 = vmatpush1.bf16.msra.mxu0 0
        %490 = vmatprep.subr.bf16.mxu0 0
        %491 = vmatpush1.bf16.msra.mxu0 0
        %492 = vmatprep.subr.bf16.mxu0 0
        %493 = vmatpush1.bf16.msra.mxu0 0
        %494 = vmatprep.subr.bf16.mxu0 0
        %495 = vmatpush1.bf16.msra.mxu0 0
        %496 = vmatprep.subr.bf16.mxu0 0
        %497 = vmatpush1.bf16.msra.mxu0 0
        %498 = vmatprep.mubr.bf16.mxu0 0
        %499 = vmatmul.mubr.bf16.gmra.mrb[0].mxu0 %v402
        %v500 = vpop.f32.mrb[0].mxu0
        %v501 = vadd.f32 %v368, %v500
        %v502 = vpop.f32.mrb[0].mxu0
        %v503 = vpop.f32.mrb[0].mxu0
        %v504 = vadd.f32 %v368, %v503
        %v505 = vpop.f32.mrb[0].mxu0
        %506 = vmatprep.mubr.bf16.mxu0 0
        %507 = vmatmul.mubr.bf16.gmra.mrb[0].mxu0 %v403
        %v508 = vpop.f32.mrb[0].mxu0
        %v509 = vadd.f32 %v368, %v508
        %v510 = vpop.f32.mrb[0].mxu0
        %v511 = vpop.f32.mrb[0].mxu0
        %v512 = vadd.f32 %v368, %v511
        %v513 = vpop.f32.mrb[0].mxu0
        %514 = vmatprep.mubr.bf16.mxu0 0
        %515 = vmatmul.mubr.bf16.gmra.mrb[0].mxu0 %v404
        %v516 = vpop.f32.mrb[0].mxu0
        %v517 = vadd.f32 %v368, %v516
        %v518 = vpop.f32.mrb[0].mxu0
        %v519 = vpop.f32.mrb[0].mxu0
        %v520 = vadd.f32 %v368, %v519
        %v521 = vpop.f32.mrb[0].mxu0
        %522 = vmatprep.mubr.bf16.mxu0 0
        %523 = vmatmul.mubr.bf16.gmra.mrb[0].mxu0 %v405
        %v524 = vpop.f32.mrb[0].mxu0
        %v525 = vadd.f32 %v368, %v524
        %v526 = vpop.f32.mrb[0].mxu0
        %v527 = vpop.f32.mrb[0].mxu0
        %v528 = vadd.f32 %v368, %v527
        %v529 = vpop.f32.mrb[0].mxu0
        %530 = vmatprep.mubr.bf16.mxu0 0
        %531 = vmatmul.mubr.bf16.gmra.mrb[0].mxu0 %v406
        %v532 = vpop.f32.mrb[0].mxu0
        %v533 = vadd.f32 %v368, %v532
        %v534 = vpop.f32.mrb[0].mxu0
        %v535 = vpop.f32.mrb[0].mxu0
        %v536 = vadd.f32 %v368, %v535
        %v537 = vpop.f32.mrb[0].mxu0
        %538 = vmatprep.mubr.bf16.mxu0 0
        %539 = vmatmul.mubr.bf16.gmra.mrb[0].mxu0 %v407
        %v540 = vpop.f32.mrb[0].mxu0
        %v541 = vadd.f32 %v368, %v540
        %v542 = vpop.f32.mrb[0].mxu0
        %v543 = vpop.f32.mrb[0].mxu0
        %v544 = vadd.f32 %v368, %v543
        %v545 = vpop.f32.mrb[0].mxu0
        %546 = vmatprep.mubr.bf16.mxu0 0
        %547 = vmatmul.mubr.bf16.gmra.mrb[0].mxu0 %v408
        %v548 = vpop.f32.mrb[0].mxu0
        %v549 = vadd.f32 %v368, %v548
        %v550 = vpop.f32.mrb[0].mxu0
        %v551 = vpop.f32.mrb[0].mxu0
        %v552 = vadd.f32 %v368, %v551
        %v553 = vpop.f32.mrb[0].mxu0
        %554 = vmatprep.mubr.bf16.mxu0 0
        %555 = vmatmul.mubr.bf16.gmra.mrb[0].mxu0 %v409
        %v556 = vpop.f32.mrb[0].mxu0
        %v557 = vadd.f32 %v368, %v556
        %v558 = vpop.f32.mrb[0].mxu0
        %v559 = vpop.f32.mrb[0].mxu0
        %v560 = vadd.f32 %v368, %v559
        %v561 = vpop.f32.mrb[0].mxu0
        %562 = vdwg.mxu0
        %v563 = vmax.f32 %v501, 0.0
        %v564 = vmax.f32 %v504, 0.0
        %v565 = vmax.f32 %v509, 0.0
        %v566 = vmax.f32 %v512, 0.0
        %v567 = vmax.f32 %v517, 0.0
        %v568 = vmax.f32 %v520, 0.0
        %v569 = vmax.f32 %v525, 0.0
        %v570 = vmax.f32 %v528, 0.0
        %v571 = vmax.f32 %v533, 0.0
        %v572 = vmax.f32 %v536, 0.0
        %v573 = vmax.f32 %v541, 0.0
        %v574 = vmax.f32 %v544, 0.0
        %v575 = vmax.f32 %v549, 0.0
        %v576 = vmax.f32 %v552, 0.0
        %v577 = vmax.f32 %v557, 0.0
        %v578 = vmax.f32 %v560, 0.0
        %v579 = vld [vmem:[#allocation2] sm:$0x1]
        %v580 = vadd.f32 %v563, %v564
        %v581 = vadd.f32 %v580, %v565
        %v582 = vadd.f32 %v581, %v566
        %v583 = vadd.f32 %v582, %v567
        %v584 = vadd.f32 %v583, %v568
        %v585 = vadd.f32 %v584, %v569
        %v586 = vadd.f32 %v585, %v570
        %v587 = vadd.f32 %v586, %v571
        %v588 = vadd.f32 %v587, %v572
        %v589 = vadd.f32 %v588, %v573
        %v590 = vadd.f32 %v589, %v574
        %v591 = vadd.f32 %v590, %v575
        %v592 = vadd.f32 %v591, %v576
        %v593 = vadd.f32 %v592, %v577
        %v594 = vadd.f32 %v593, %v578
        %v595 = vrot.slane %v594, 4
        %v596 = vadd.f32 %v594, %v595
        %v597 = vrot.slane %v596, 2
        %v598 = vadd.f32 %v596, %v597
        %v599 = vrot.slane %v598, 1
        %v600 = vadd.f32 %v598, %v599
        %v601 = vadd.f32 %v579, %v600
        %602 = vst [vmem:[#allocation2] sm:$0x1] %v601
        %p603 = scmp.eq.s32.totalorder %s33, 1
        // Predicated region
        $region57: #{tpu_custom_call.1} parent=39 // pred_check
          %p604 = pneg %p603
        $region58: #{tpu_custom_call.1} parent=39 // pred_check_branch
          %606 = sbr.rel (%p604) target = $region60
        $region59: #{tpu_custom_call.1} parent=39 // pred_region
          %v607 = vld [vmem:[#allocation2] sm:$0x1]
          %v608 = vmul.f32 %v607, 0.00390625
          %609 = vst [vmem:[%s317] sm:$0x1] %v608
          %v610 = vpack.c.bf16 %v608, %v608
          %v611 = vld [vmem:[#allocation8] sm:$0xf]
          %v612 = vld [vmem:[#allocation8 + $0x4] sm:$0xf]
          %v613 = vld [vmem:[#allocation8 + $0x8] sm:$0xf]
          %v614 = vld [vmem:[#allocation8 + $0xc] sm:$0xf]
          %v615 = vld [vmem:[#allocation8 + $0x10] sm:$0xf]
          %v616 = vld [vmem:[#allocation8 + $0x14] sm:$0xf]
          %v617 = vld [vmem:[#allocation8 + $0x18] sm:$0xf]
          %v618 = vld [vmem:[#allocation8 + $0x1c] sm:$0xf]
          %v619 = vld [vmem:[#allocation8 + $0x20] sm:$0xf]
          %v620 = vld [vmem:[#allocation8 + $0x24] sm:$0xf]
          %v621 = vld [vmem:[#allocation8 + $0x28] sm:$0xf]
          %v622 = vld [vmem:[#allocation8 + $0x2c] sm:$0xf]
          %v623 = vld [vmem:[#allocation8 + $0x30] sm:$0xf]
          %v624 = vld [vmem:[#allocation8 + $0x34] sm:$0xf]
          %v625 = vld [vmem:[#allocation8 + $0x38] sm:$0xf]
          %v626 = vld [vmem:[#allocation8 + $0x3c] sm:$0xf]
          %v627 = vld [vmem:[%s4] sm:$0x1]
          %v644 = vunpack.c.l.b16 %v611
          %v645 = vunpack.c.l.b16 %v612
          %v646 = vunpack.c.l.b16 %v613
          %v647 = vunpack.c.l.b16 %v614
          %v648 = vunpack.c.l.b16 %v615
          %v649 = vunpack.c.l.b16 %v616
          %v650 = vunpack.c.l.b16 %v617
          %v651 = vunpack.c.l.b16 %v618
          %v652 = vunpack.c.l.b16 %v619
          %v653 = vunpack.c.l.b16 %v620
          %v654 = vunpack.c.l.b16 %v621
          %v655 = vunpack.c.l.b16 %v622
          %v656 = vunpack.c.l.b16 %v623
          %v657 = vunpack.c.l.b16 %v624
          %v658 = vunpack.c.l.b16 %v625
          %v659 = vunpack.c.l.b16 %v626
          %v660 = vpack.c.b16 %v645, %v644
          %v661 = vpack.c.b16 %v647, %v646
          %v662 = vpack.c.b16 %v649, %v648
          %v663 = vpack.c.b16 %v651, %v650
          %v664 = vpack.c.b16 %v653, %v652
          %v665 = vpack.c.b16 %v655, %v654
          %v666 = vpack.c.b16 %v657, %v656
          %v667 = vpack.c.b16 %v659, %v658
          %676 = vmatprep.subr.bf16.mxu0 0
          %677 = vmatpush1.bf16.msra.mxu0 %v660
          %678 = vmatprep.subr.bf16.mxu0 0
          %679 = vmatpush1.bf16.msra.mxu0 %v661
          %680 = vmatprep.subr.bf16.mxu0 0
          %681 = vmatpush1.bf16.msra.mxu0 %v662
          %682 = vmatprep.subr.bf16.mxu0 0
          %683 = vmatpush1.bf16.msra.mxu0 %v663
          %684 = vmatprep.subr.bf16.mxu0 0
          %685 = vmatpush1.bf16.msra.mxu0 %v664
          %686 = vmatprep.subr.bf16.mxu0 0
          %687 = vmatpush1.bf16.msra.mxu0 %v665
          %688 = vmatprep.subr.bf16.mxu0 0
          %689 = vmatpush1.bf16.msra.mxu0 %v666
          %690 = vmatprep.subr.bf16.mxu0 0
          %691 = vmatpush1.bf16.msra.mxu0 %v667
          %692 = vmatprep.subr.bf16.mxu0 0
          %693 = vmatpush1.bf16.msra.mxu0 0
          %694 = vmatprep.subr.bf16.mxu0 0
          %695 = vmatpush1.bf16.msra.mxu0 0
          %696 = vmatprep.subr.bf16.mxu0 0
          %697 = vmatpush1.bf16.msra.mxu0 0
          %698 = vmatprep.subr.bf16.mxu0 0
          %699 = vmatpush1.bf16.msra.mxu0 0
          %700 = vmatprep.subr.bf16.mxu0 0
          %701 = vmatpush1.bf16.msra.mxu0 0
          %702 = vmatprep.subr.bf16.mxu0 0
          %703 = vmatpush1.bf16.msra.mxu0 0
          %704 = vmatprep.subr.bf16.mxu0 0
          %705 = vmatpush1.bf16.msra.mxu0 0
          %706 = vmatprep.subr.bf16.mxu0 0
          %707 = vmatpush1.bf16.msra.mxu0 0
          %708 = vmatprep.mubr.bf16.mxu0 0
          %709 = vmatmul.mubr.bf16.gmra.mrb[0].mxu0 %v610
          %v710 = vpop.f32.mrb[0].mxu0
          %v711 = vadd.f32 %v627, %v710
          %v712 = vpop.f32.mrb[0].mxu0
          %v713 = vpop.f32.mrb[0].mxu0
          %v714 = vpop.f32.mrb[0].mxu0
          %715 = vdwg.mxu0
          %716 = vst [vmem:[%s323] sm:$0x1] %v711
        $region60: #{tpu_custom_call.1} parent=39 // pred_fallthru
          _
        %s717 = sand.u32 %s160, 1
        %s718 = scalar_lea.sflag [#allocation5], %s717
        %s719 = sand.u32 %s160, 1
        %s720 = scalar_lea.vmem [#allocation9], %s719
        %s721 = sand.u32 %s186, 1
        %s722 = scalar_lea.sflag [#allocation11], %s721
        %s723 = sand.u32 %s186, 1
        %s724 = scalar_lea.vmem [#allocation10], %s723
        // Predicated region
        $region61: #{tpu_custom_call.1} parent=39 // pred_check
          %p725 = pneg %p170
        $region62: #{tpu_custom_call.1} parent=39 // pred_check_branch
          %727 = sbr.rel (%p725) target = $region64
        $region63: #{tpu_custom_call.1} parent=39 // pred_region
          %s729 = ssub.s32 16, 16
          %730 = vsyncadd %s718, %s729
          %s731 = smul.addr %s32, 16
          %s732 = scalar_lea.hbm %s5, %s731
          %s734 = sshll.u32 %s720, 4
          %s735 = int_to_ptr.vmem [resolvable:$true] %s734
          %737 = dma.vmem_to_hbm [thread:$0]  %s735, 16, %s732, %s718
        $region64: #{tpu_custom_call.1} parent=39 // pred_fallthru
          _
        // Predicated region
        $region65: #{tpu_custom_call.1} parent=39 // pred_check
          %p738 = pneg %p196
        $region66: #{tpu_custom_call.1} parent=39 // pred_check_branch
          %740 = sbr.rel (%p738) target = $region68
        $region67: #{tpu_custom_call.1} parent=39 // pred_region
          %s742 = ssub.s32 16, 16
          %743 = vsyncadd %s722, %s742
          %s744 = smul.addr %s32, 16
          %s745 = scalar_lea.hbm %s6, %s744
          %s747 = sshll.u32 %s724, 4
          %s748 = int_to_ptr.vmem [resolvable:$true] %s747
          %750 = dma.vmem_to_hbm [thread:$0]  %s748, 16, %s745, %s722
        $region68: #{tpu_custom_call.1} parent=39 // pred_fallthru
          _
      $region40: #{tpu_custom_call.1} parent=5 // pred_fallthru
        _
      %p751 = scmp.le.s32.totalorder 2, %s23
      // Predicated region
      $region69: #{tpu_custom_call.1} parent=5 // pred_check
        %p752 = pneg %p751
      $region70: #{tpu_custom_call.1} parent=5 // pred_check_branch
        %754 = sbr.rel (%p752) target = $region72
      $region71: #{tpu_custom_call.1} parent=5 // pred_region
        %s755 = ssub.s32 %s23, 2
        // Predicated region
        $region73: #{tpu_custom_call.1} parent=71 // pred_check
          %p756 = pneg %p176
        $region74: #{tpu_custom_call.1} parent=71 // pred_check_branch
          %758 = sbr.rel (%p756) target = $region76
        $region75: #{tpu_custom_call.1} parent=71 // pred_region
          %s759 = sand.u32 %s161, 1
          %s760 = scalar_lea.sflag [#allocation5], %s759
          %s761 = sand.u32 %s161, 1
          %s762 = scalar_lea.vmem [#allocation9], %s761
          %763 = dma.done %s760, 16
        $region76: #{tpu_custom_call.1} parent=71 // pred_fallthru
          _
        // Predicated region
        $region77: #{tpu_custom_call.1} parent=71 // pred_check
          %p764 = pneg %p202
        $region78: #{tpu_custom_call.1} parent=71 // pred_check_branch
          %766 = sbr.rel (%p764) target = $region80
        $region79: #{tpu_custom_call.1} parent=71 // pred_region
          %s767 = sand.u32 %s187, 1
          %s768 = scalar_lea.sflag [#allocation11], %s767
          %s769 = sand.u32 %s187, 1
          %s770 = scalar_lea.vmem [#allocation10], %s769
          %771 = dma.done %s768, 16
        $region80: #{tpu_custom_call.1} parent=71 // pred_fallthru
          _
      $region72: #{tpu_custom_call.1} parent=5 // pred_fallthru
        _
    $region6: #{tpu_custom_call.1} parent=1 // loop_footer
      %s27 = sadd.s32 1, %s23
    $region7: #{tpu_custom_call.1} parent=1 // loop_footer_branch
      %22 = sbr.rel target = $region3
    $region8: #{tpu_custom_call.1} parent=1 // loop_exit
      _
    %772 = vsyncpa [#allocation4], 1
    %s773 = scalar_lea.sflag [#allocation4], 1
    %774 = vsyncpa %s773, 1
    %775 = vsyncpa [#allocation7], 1
    %776 = vsyncpa [#allocation5], 1
    %s777 = scalar_lea.sflag [#allocation5], 1
    %778 = vsyncpa %s777, 1
    %779 = vsyncpa [#allocation11], 1
    %s780 = scalar_lea.sflag [#allocation11], 1
    %781 = vsyncpa %s780, 1

</llo_original>
